<compile_context>
chip_gen: v7x
topology: tpu7x:2x2x1
jax: 0.10.0
libtpu: 0.0.40
codegen_flags: <defaults>
</compile_context>

<pallas_src>
import functools

import jax
import jax.numpy as jnp
from jax.experimental import pallas as pl
from jax.experimental.pallas import tpu as pltpu

LANES = 128       # pad hidden / action dims to a full vreg lane width
_MIN_TILE = 256   # don't shrink batch tiles below this (per-step overhead)
_MAX_TILE = 4096  # keeps double-buffered tiles << 16 MiB default scoped VMEM


def _round_up(n, m):
    return ((n + m - 1) // m) * m


def _choose_tile(batch, tile_b):
    """Pick a batch tile: big, multiple of 8, >=2 grid steps when worthwhile,
    and without pathological round-up padding."""
    b8 = _round_up(batch, 8)
    tb = max(8, min(tile_b, _MAX_TILE, b8))
    # v7x: ensure the batch grid has >= 2 steps so both TensorCores get work.
    if b8 <= tb and b8 >= 2 * _MIN_TILE:
        tb = _round_up((b8 + 1) // 2, 8)
    # Avoid wasting more than half a tile on padding for mid-size batches.
    while tb > _MIN_TILE and _round_up(batch, tb) - batch > tb // 2:
        tb = _round_up(tb // 2, 8)
    return tb, _round_up(batch, tb)


def action_net_kernel(x_ref, w_ref, b_ref, out_ref, *, in_dim):
    """x_ref: (TB,in_dim) f32; w_ref: (3,128,128) bf16; b_ref: (3,1,128) f32;
    out_ref: (TB,128) bf16."""
    h = x_ref[...].astype(jnp.bfloat16)  # cast activations in-kernel

    # fc1 + ReLU (real K = in_dim -> half the MXU passes of padded K=128)
    z = jnp.dot(h, w_ref[0, :in_dim, :],
                preferred_element_type=jnp.float32) + b_ref[0]
    h = jnp.maximum(z, 0.0).astype(jnp.bfloat16)

    # fc2 + ReLU
    z = jnp.dot(h, w_ref[1], preferred_element_type=jnp.float32) + b_ref[1]
    h = jnp.maximum(z, 0.0).astype(jnp.bfloat16)

    # action_out + tanh; bf16 lane-dense 128-wide store (halves HBM writeback)
    z = jnp.dot(h, w_ref[2], preferred_element_type=jnp.float32) + b_ref[2]
    out_ref[...] = jnp.tanh(z).astype(out_ref.dtype)


def pack_params(params):
    """Pack + zero-pad the 3 (W, b) pairs into 2 operands.

    Call ONCE when params change (outside the per-step hot path), not per
    forward call.  W is stored (in, out).
    """
    w_list, b_list = [], []
    for w, b in params:
        assert w.shape[0] <= LANES and w.shape[1] <= LANES, (
            "action_net kernel packs weights into 128x128 tiles; "
            f"got {w.shape}")
        wp = jnp.zeros((LANES, LANES), jnp.float32)
        wp = wp.at[: w.shape[0], : w.shape[1]].set(w)
        bp = jnp.zeros((LANES,), jnp.float32).at[: b.shape[0]].set(b)
        w_list.append(wp)
        b_list.append(bp)
    w_packed = jnp.stack(w_list).astype(jnp.bfloat16)  # (3, 128, 128) bf16
    b_packed = jnp.stack(b_list)[:, None, :]           # (3, 1, 128)   f32
    return w_packed, b_packed


def action_net_forward(x, w_packed, b_packed, act_dim, *, tile_b=1024):
    """x: (B, 64) f32. w_packed/b_packed from pack_params. Returns (B, act_dim) bf16."""
    B, in_dim = x.shape
    tb, b_pad = _choose_tile(B, tile_b)

    # Pad only the batch dim when needed (no 128-lane x_pad materialization).
    x_in = x if b_pad == B else jnp.pad(x, ((0, b_pad - B), (0, 0)))

    const3 = lambda i: (0, 0, 0)
    out = pl.pallas_call(
        functools.partial(action_net_kernel, in_dim=in_dim),
        out_shape=jax.ShapeDtypeStruct((b_pad, LANES), jnp.bfloat16),
        grid=(b_pad // tb,),
        in_specs=[
            # activations: full (64-wide) feature dim, f32 straight from HBM
            pl.BlockSpec((tb, in_dim), lambda i: (i, 0)),
            # packed weights / biases: constant index_map -> VMEM-resident;
            # single-buffered since they never change across grid steps.
            pl.BlockSpec((3, LANES, LANES), const3,
                         pipeline_mode=pl.Buffered(1)),
            pl.BlockSpec((3, 1, LANES), const3,
                         pipeline_mode=pl.Buffered(1)),
        ],
        out_specs=pl.BlockSpec((tb, LANES), lambda i: (i, 0)),
        compiler_params=pltpu.CompilerParams(
            dimension_semantics=("parallel",)),
    )(x_in, w_packed, b_packed)

    return out[:B, :act_dim]


def init_params(key, act_dim, hidden=64):
    """Mirror the 3 nn.Linear layers (W stored as (in, out))."""
    dims = [(hidden, hidden), (hidden, hidden), (hidden, act_dim)]
    params = []
    for din, dout in dims:
        key, kw, kb = jax.random.split(key, 3)
        bound = 1.0 / jnp.sqrt(din)  # PyTorch Linear default uniform bound
        w = jax.random.uniform(kw, (din, dout), jnp.float32, -bound, bound)
        b = jax.random.uniform(kb, (dout,), jnp.float32, -bound, bound)
        params.append((w, b))
    return params


def action_net_reference(x, params):
    """Plain-JAX f32 reference for correctness checking."""
    h = x
    for i, (w, b) in enumerate(params):
        h = h @ w + b
        h = jnp.tanh(h) if i == len(params) - 1 else jnp.maximum(h, 0.0)
    return h


if __name__ == "__main__":
    key = jax.random.PRNGKey(0)
    B, IN_DIM, ACT_DIM = 8, 64, 4  # fc1/fc2 are 64-wide; action_shape[agent_id]=4

    key, kx = jax.random.split(key)
    x = jax.random.normal(kx, (B, IN_DIM), jnp.float32)
    params = init_params(key, ACT_DIM)

    # Pack weights once, outside the per-call hot path.
    w_packed, b_packed = pack_params(params)

    out = action_net_forward(x, w_packed, b_packed, ACT_DIM)
    out = jax.block_until_ready(out)

    ref = action_net_reference(x, params)
    assert out.shape == (B, ACT_DIM)
    # bf16 matmul inputs + bf16 output store -> loosened tolerance vs f32 ref.
    assert jnp.allclose(out.astype(jnp.float32), ref, atol=2e-2, rtol=2e-2)

    print("KERNEL_OK")
</pallas_src>

<mosaic_0001>
module attributes {stable_mosaic.version = 11 : i64} {
  func.func @action_net_kernel(%arg0: i32, %arg1: memref<8x64xf32, #tpu.memory_space<vmem>>, %arg2: memref<3x128x128xbf16, #tpu.memory_space<vmem>>, %arg3: memref<3x1x128xf32, #tpu.memory_space<vmem>>, %arg4: memref<8x128xbf16, #tpu.memory_space<vmem>>) attributes {dimension_semantics = [#tpu.dimension_semantics<parallel>], iteration_bounds = array<i64: 1>, scalar_prefetch = 0 : i64, scratch_operands = 0 : i64, tpu.core_type = #tpu.core_type<tc>, window_params = [{transform_indices = @transform_0, window_bounds = array<i64: 8, 64>}, {pipeline_mode = #tpu.pipeline_mode<synchronous>, transform_indices = @transform_1, window_bounds = array<i64: 3, 128, 128>}, {pipeline_mode = #tpu.pipeline_mode<synchronous>, transform_indices = @transform_2, window_bounds = array<i64: 3, 1, 128>}, {transform_indices = @transform_3, window_bounds = array<i64: 8, 128>}]} {
    %c0 = arith.constant 0 : index
    %c0_0 = arith.constant 0 : index
    %0 = vector.load %arg1[%c0, %c0_0] : memref<8x64xf32, #tpu.memory_space<vmem>>, vector<8x64xf32>
    %1 = arith.truncf %0 : vector<8x64xf32> to vector<8x64xbf16>
    %c0_1 = arith.constant 0 : index
    %c0_2 = arith.constant 0 : index
    %c0_3 = arith.constant 0 : index
    %2 = vector.load %arg2[%c0_1, %c0_2, %c0_3] : memref<3x128x128xbf16, #tpu.memory_space<vmem>>, vector<1x64x128xbf16>
    %3 = vector.shape_cast %2 : vector<1x64x128xbf16> to vector<64x128xbf16>
    %cst = arith.constant dense<0.000000e+00> : vector<8x128xf32>
    %4 = tpu.matmul %1, %3, %cst {dimension_numbers = #tpu.dot_dimension_numbers<[1], [0], [0], [1], [0, 0, 1, 1], [], []>} : vector<8x64xbf16>, vector<64x128xbf16>, vector<8x128xf32> -> vector<8x128xf32>
    %c0_4 = arith.constant 0 : index
    %c0_5 = arith.constant 0 : index
    %c0_6 = arith.constant 0 : index
    %5 = vector.load %arg3[%c0_4, %c0_5, %c0_6] : memref<3x1x128xf32, #tpu.memory_space<vmem>>, vector<1x1x128xf32>
    %6 = vector.shape_cast %5 : vector<1x1x128xf32> to vector<1x128xf32>
    %7 = vector.broadcast %6 : vector<1x128xf32> to vector<8x128xf32>
    %8 = arith.addf %4, %7 : vector<8x128xf32>
    %cst_7 = arith.constant 0.000000e+00 : f32
    %9 = vector.broadcast %cst_7 : f32 to vector<8x128xf32>
    %10 = arith.maximumf %8, %9 : vector<8x128xf32>
    %11 = arith.truncf %10 : vector<8x128xf32> to vector<8x128xbf16>
    %c1 = arith.constant 1 : index
    %c0_8 = arith.constant 0 : index
    %c0_9 = arith.constant 0 : index
    %12 = vector.load %arg2[%c1, %c0_8, %c0_9] : memref<3x128x128xbf16, #tpu.memory_space<vmem>>, vector<1x128x128xbf16>
    %13 = vector.shape_cast %12 : vector<1x128x128xbf16> to vector<128x128xbf16>
    %cst_10 = arith.constant dense<0.000000e+00> : vector<8x128xf32>
    %14 = tpu.matmul %11, %13, %cst_10 {dimension_numbers = #tpu.dot_dimension_numbers<[1], [0], [0], [1], [0, 0, 1, 1], [], []>} : vector<8x128xbf16>, vector<128x128xbf16>, vector<8x128xf32> -> vector<8x128xf32>
    %c1_11 = arith.constant 1 : index
    %c0_12 = arith.constant 0 : index
    %c0_13 = arith.constant 0 : index
    %15 = vector.load %arg3[%c1_11, %c0_12, %c0_13] : memref<3x1x128xf32, #tpu.memory_space<vmem>>, vector<1x1x128xf32>
    %16 = vector.shape_cast %15 : vector<1x1x128xf32> to vector<1x128xf32>
    %17 = vector.broadcast %16 : vector<1x128xf32> to vector<8x128xf32>
    %18 = arith.addf %14, %17 : vector<8x128xf32>
    %cst_14 = arith.constant 0.000000e+00 : f32
    %19 = vector.broadcast %cst_14 : f32 to vector<8x128xf32>
    %20 = arith.maximumf %18, %19 : vector<8x128xf32>
    %21 = arith.truncf %20 : vector<8x128xf32> to vector<8x128xbf16>
    %c2 = arith.constant 2 : index
    %c0_15 = arith.constant 0 : index
    %c0_16 = arith.constant 0 : index
    %22 = vector.load %arg2[%c2, %c0_15, %c0_16] : memref<3x128x128xbf16, #tpu.memory_space<vmem>>, vector<1x128x128xbf16>
    %23 = vector.shape_cast %22 : vector<1x128x128xbf16> to vector<128x128xbf16>
    %cst_17 = arith.constant dense<0.000000e+00> : vector<8x128xf32>
    %24 = tpu.matmul %21, %23, %cst_17 {dimension_numbers = #tpu.dot_dimension_numbers<[1], [0], [0], [1], [0, 0, 1, 1], [], []>} : vector<8x128xbf16>, vector<128x128xbf16>, vector<8x128xf32> -> vector<8x128xf32>
    %c2_18 = arith.constant 2 : index
    %c0_19 = arith.constant 0 : index
    %c0_20 = arith.constant 0 : index
    %25 = vector.load %arg3[%c2_18, %c0_19, %c0_20] : memref<3x1x128xf32, #tpu.memory_space<vmem>>, vector<1x1x128xf32>
    %26 = vector.shape_cast %25 : vector<1x1x128xf32> to vector<1x128xf32>
    %27 = vector.broadcast %26 : vector<1x128xf32> to vector<8x128xf32>
    %28 = arith.addf %24, %27 : vector<8x128xf32>
    %29 = math.tanh %28 : vector<8x128xf32>
    %30 = arith.truncf %29 : vector<8x128xf32> to vector<8x128xbf16>
    %c0_21 = arith.constant 0 : index
    %c0_22 = arith.constant 0 : index
    %31 = vector.load %arg4[%c0_21, %c0_22] : memref<8x128xbf16, #tpu.memory_space<vmem>>, vector<8x128xbf16>
    tpu.vector_store %arg4[%c0_21, %c0_22], %30 {strides = array<i32>} : memref<8x128xbf16, #tpu.memory_space<vmem>>, vector<8x128xbf16>,
    return
  }
  func.func @transform_0(%arg0: i32) -> (i32, i32) {
    %c0_i32 = arith.constant 0 : i32
    %c0_i32_0 = arith.constant 0 : i32
    return %arg0, %c0_i32 : i32, i32
  }
  func.func @transform_1(%arg0: i32) -> (i32, i32, i32) {
    %c0_i32 = arith.constant 0 : i32
    %c0_i32_0 = arith.constant 0 : i32
    %c0_i32_1 = arith.constant 0 : i32
    %c0_i32_2 = arith.constant 0 : i32
    return %c0_i32, %c0_i32_0, %c0_i32_1 : i32, i32, i32
  }
  func.func @transform_2(%arg0: i32) -> (i32, i32, i32) {
    %c0_i32 = arith.constant 0 : i32
    %c0_i32_0 = arith.constant 0 : i32
    %c0_i32_1 = arith.constant 0 : i32
    %c0_i32_2 = arith.constant 0 : i32
    return %c0_i32, %c0_i32_0, %c0_i32_1 : i32, i32, i32
  }
  func.func @transform_3(%arg0: i32) -> (i32, i32) {
    %c0_i32 = arith.constant 0 : i32
    %c0_i32_0 = arith.constant 0 : i32
    return %arg0, %c0_i32 : i32, i32
  }
}

</mosaic_0001>

<llo_original>
// kernel: tpu_custom_call.1
$region0: #{tpu_custom_call.1}
  #allocation0 [shape = 'u32[]', space=smem, size = 0x4, offset = 0x4, fixed_abs, tag = 'smem constant byte address 0x4 - core index']
  #allocation1 [shape = 'u32[144,128]{1,0:T(1,128)}', space=vmem, size = 0x12000, scoped, tag = 'internal scratch']
  %s0 = inlined_call_operand.hbm [shape: f32[8,64], index: 0, kind: input, shape index: {}]
  %s1 = inlined_call_operand.hbm [shape: bf16[3,128,128], index: 1, kind: input, shape index: {}]
  %s2 = inlined_call_operand.vmem [shape: f32[3,1,128], index: 2, kind: input, shape index: {}]
  %s3 = inlined_call_operand.hbm [shape: bf16[8,128], index: 3, kind: output, shape index: {}]
  %s4 = sld [smem:[#allocation0]]
  $region30: #{tpu_custom_call.1} parent=0
    _
  %s6 = ssub.s32 1, %s4
  %s7 = scalar_select 0, %s6, %s4
  $region1: #{tpu_custom_call.1} parent=0
    #allocation2 [shape = 'u8[4096]{0}', space=vmem, size = 0x1000, scoped, tag = 'input window, operand 0, single buffered']
    #allocation3 [shape = 's32[1]{0}', space=sflag, size = 0x4, scoped, tag = 'scoped memory for tpu_custom_call.1']
    #allocation4 [shape = 's32[1]{0}', space=sflag, size = 0x4, scoped, tag = 'scoped memory for tpu_custom_call.1']
    #allocation5 [shape = 'u8[98304]{0}', space=vmem, size = 0x18000, scoped, tag = 'input window, operand 1, single buffered']
    #allocation6 [shape = 's32[1]{0}', space=sflag, size = 0x4, scoped, tag = 'scoped memory for tpu_custom_call.1']
    #allocation7 [shape = 'u8[2048]{0}', space=vmem, size = 0x800, scoped, tag = 'output window, operand 0, single buffered']
    %8 = vsyncpa [#allocation3], 0
    %9 = vsyncpa [#allocation6], 0
    %10 = vsyncpa [#allocation4], 0
    // Predicated region
    $region2: #{tpu_custom_call.1} parent=1 // pred_check
      _
    $region3: #{tpu_custom_call.1} parent=1 // pred_check_branch
      %12 = sbr.rel (0) target = $region5
    $region4: #{tpu_custom_call.1} parent=1 // pred_region
      %s14 = ssub.s32 128, 128
      %15 = vsyncadd [#allocation3], %s14
      %s17 = sshll.u32 [#allocation2], 4
      %s18 = int_to_ptr.vmem [resolvable:$true] %s17
      %20 = dma.hbm_to_vmem [thread:$0]  %s0, 128, %s18, [#allocation3]
    $region5: #{tpu_custom_call.1} parent=1 // pred_fallthru
      _
    // Predicated region
    $region6: #{tpu_custom_call.1} parent=1 // pred_check
      _
    $region7: #{tpu_custom_call.1} parent=1 // pred_check_branch
      %22 = sbr.rel (0) target = $region9
    $region8: #{tpu_custom_call.1} parent=1 // pred_region
      %s24 = ssub.s32 3072, 3072
      %25 = vsyncadd [#allocation6], %s24
      %s26 = sshll.u32 [#allocation5], 4
      %s27 = int_to_ptr.vmem [resolvable:$true] %s26
      %32 = dma.hbm_to_vmem [thread:$0]  %s1, 3072, %s27, [#allocation6], 64, 64, 4
    $region9: #{tpu_custom_call.1} parent=1 // pred_fallthru
      _
    // Predicated region
    $region10: #{tpu_custom_call.1} parent=1 // pred_check
      _
    $region11: #{tpu_custom_call.1} parent=1 // pred_check_branch
      %34 = sbr.rel (0) target = $region13
    $region12: #{tpu_custom_call.1} parent=1 // pred_region
      _
    $region13: #{tpu_custom_call.1} parent=1 // pred_fallthru
      _
    // Predicated region
    $region14: #{tpu_custom_call.1} parent=1 // pred_check
      _
    $region15: #{tpu_custom_call.1} parent=1 // pred_check_branch
      %36 = sbr.rel (0) target = $region17
    $region16: #{tpu_custom_call.1} parent=1 // pred_region
      %37 = dma.done [#allocation3], 128
    $region17: #{tpu_custom_call.1} parent=1 // pred_fallthru
      _
    // Predicated region
    $region18: #{tpu_custom_call.1} parent=1 // pred_check
      _
    $region19: #{tpu_custom_call.1} parent=1 // pred_check_branch
      %39 = sbr.rel (0) target = $region21
    $region20: #{tpu_custom_call.1} parent=1 // pred_region
      %40 = dma.done [#allocation6], 3072
    $region21: #{tpu_custom_call.1} parent=1 // pred_fallthru
      _
    %v42 = vld [vmem:[#allocation2] sm:$0xff]
    %v43 = vpack.c.bf16 %v42, %v42
    %v44 = vld [vmem:[#allocation5] sm:$0xf]
    %v45 = vld [vmem:[#allocation5 + $0x4] sm:$0xf]
    %v46 = vld [vmem:[#allocation5 + $0x8] sm:$0xf]
    %v47 = vld [vmem:[#allocation5 + $0xc] sm:$0xf]
    %v48 = vld [vmem:[#allocation5 + $0x10] sm:$0xf]
    %v49 = vld [vmem:[#allocation5 + $0x14] sm:$0xf]
    %v50 = vld [vmem:[#allocation5 + $0x18] sm:$0xf]
    %v51 = vld [vmem:[#allocation5 + $0x1c] sm:$0xf]
    %v52 = vld [vmem:[%s2] sm:$0x1]
    %v54 = vlaneseq
    %v55 = vshrl.u32 %v54, 7
    %v56 = vsub.s32 0, %v55
    %v57 = vrot.slane %v52, %v56
    %v67 = vunpack.c.l.b16 %v44
    %v68 = vunpack.c.l.b16 %v45
    %v69 = vunpack.c.l.b16 %v46
    %v70 = vunpack.c.l.b16 %v47
    %v71 = vunpack.c.l.b16 %v48
    %v72 = vunpack.c.l.b16 %v49
    %v73 = vunpack.c.l.b16 %v50
    %v74 = vunpack.c.l.b16 %v51
    %v75 = vpack.c.b16 %v68, %v67
    %v76 = vpack.c.b16 %v70, %v69
    %v77 = vpack.c.b16 %v72, %v71
    %v78 = vpack.c.b16 %v74, %v73
    %vm83 = vcmask 523264
    %v85 = vsel %vm83, %v43, 0
    %87 = vmatprep.subr.bf16.mxu0 0
    %88 = vmatpush1.bf16.msra.mxu0 %v75
    %89 = vmatprep.subr.bf16.mxu0 0
    %90 = vmatpush1.bf16.msra.mxu0 %v76
    %91 = vmatprep.subr.bf16.mxu0 0
    %92 = vmatpush1.bf16.msra.mxu0 %v77
    %93 = vmatprep.subr.bf16.mxu0 0
    %94 = vmatpush1.bf16.msra.mxu0 %v78
    %95 = vmatprep.subr.bf16.mxu0 0
    %96 = vmatpush1.bf16.msra.mxu0 0
    %97 = vmatprep.subr.bf16.mxu0 0
    %98 = vmatpush1.bf16.msra.mxu0 0
    %99 = vmatprep.subr.bf16.mxu0 0
    %100 = vmatpush1.bf16.msra.mxu0 0
    %101 = vmatprep.subr.bf16.mxu0 0
    %102 = vmatpush1.bf16.msra.mxu0 0
    %103 = vmatprep.subr.bf16.mxu0 0
    %104 = vmatpush1.bf16.msra.mxu0 0
    %105 = vmatprep.subr.bf16.mxu0 0
    %106 = vmatpush1.bf16.msra.mxu0 0
    %107 = vmatprep.subr.bf16.mxu0 0
    %108 = vmatpush1.bf16.msra.mxu0 0
    %109 = vmatprep.subr.bf16.mxu0 0
    %110 = vmatpush1.bf16.msra.mxu0 0
    %111 = vmatprep.subr.bf16.mxu0 0
    %112 = vmatpush1.bf16.msra.mxu0 0
    %113 = vmatprep.subr.bf16.mxu0 0
    %114 = vmatpush1.bf16.msra.mxu0 0
    %115 = vmatprep.subr.bf16.mxu0 0
    %116 = vmatpush1.bf16.msra.mxu0 0
    %117 = vmatprep.subr.bf16.mxu0 0
    %118 = vmatpush1.bf16.msra.mxu0 0
    %119 = vmatprep.mubr.bf16.mxu0 0
    %120 = vmatmul.mubr.bf16.gmra.mrb[0].mxu0 %v85
    %v121 = vpop.f32.mrb[0].mxu0
    %v122 = vadd.f32 %v57, %v121
    %v123 = vpop.f32.mrb[0].mxu0
    %v124 = vpop.f32.mrb[0].mxu0
    %v125 = vpop.f32.mrb[0].mxu0
    %126 = vdwg.mxu0
    %v127 = vmax.f32 %v122, 0.0
    %v128 = vpack.c.bf16 %v127, %v127
    %s129 = scalar_lea.vmem [#allocation5], 64
    %v130 = vld [vmem:[%s129] sm:$0xf]
    %v131 = vld [vmem:[%s129 + $0x4] sm:$0xf]
    %v132 = vld [vmem:[%s129 + $0x8] sm:$0xf]
    %v133 = vld [vmem:[%s129 + $0xc] sm:$0xf]
    %v134 = vld [vmem:[%s129 + $0x10] sm:$0xf]
    %v135 = vld [vmem:[%s129 + $0x14] sm:$0xf]
    %v136 = vld [vmem:[%s129 + $0x18] sm:$0xf]
    %v137 = vld [vmem:[%s129 + $0x1c] sm:$0xf]
    %v138 = vld [vmem:[%s129 + $0x20] sm:$0xf]
    %v139 = vld [vmem:[%s129 + $0x24] sm:$0xf]
    %v140 = vld [vmem:[%s129 + $0x28] sm:$0xf]
    %v141 = vld [vmem:[%s129 + $0x2c] sm:$0xf]
    %v142 = vld [vmem:[%s129 + $0x30] sm:$0xf]
    %v143 = vld [vmem:[%s129 + $0x34] sm:$0xf]
    %v144 = vld [vmem:[%s129 + $0x38] sm:$0xf]
    %v145 = vld [vmem:[%s129 + $0x3c] sm:$0xf]
    %s146 = scalar_lea.vmem %s2, 1
    %v147 = vld [vmem:[%s146] sm:$0x1]
    %v149 = vlaneseq
    %v150 = vshrl.u32 %v149, 7
    %v151 = vsub.s32 0, %v150
    %v152 = vrot.slane %v147, %v151
    %v170 = vunpack.c.l.b16 %v130
    %v171 = vunpack.c.l.b16 %v131
    %v172 = vunpack.c.l.b16 %v132
    %v173 = vunpack.c.l.b16 %v133
    %v174 = vunpack.c.l.b16 %v134
    %v175 = vunpack.c.l.b16 %v135
    %v176 = vunpack.c.l.b16 %v136
    %v177 = vunpack.c.l.b16 %v137
    %v178 = vunpack.c.l.b16 %v138
    %v179 = vunpack.c.l.b16 %v139
    %v180 = vunpack.c.l.b16 %v140
    %v181 = vunpack.c.l.b16 %v141
    %v182 = vunpack.c.l.b16 %v142
    %v183 = vunpack.c.l.b16 %v143
    %v184 = vunpack.c.l.b16 %v144
    %v185 = vunpack.c.l.b16 %v145
    %v186 = vpack.c.b16 %v171, %v170
    %v187 = vpack.c.b16 %v173, %v172
    %v188 = vpack.c.b16 %v175, %v174
    %v189 = vpack.c.b16 %v177, %v176
    %v190 = vpack.c.b16 %v179, %v178
    %v191 = vpack.c.b16 %v181, %v180
    %v192 = vpack.c.b16 %v183, %v182
    %v193 = vpack.c.b16 %v185, %v184
    %202 = vmatprep.subr.bf16.mxu0 0
    %203 = vmatpush1.bf16.msra.mxu0 %v186
    %204 = vmatprep.subr.bf16.mxu0 0
    %205 = vmatpush1.bf16.msra.mxu0 %v187
    %206 = vmatprep.subr.bf16.mxu0 0
    %207 = vmatpush1.bf16.msra.mxu0 %v188
    %208 = vmatprep.subr.bf16.mxu0 0
    %209 = vmatpush1.bf16.msra.mxu0 %v189
    %210 = vmatprep.subr.bf16.mxu0 0
    %211 = vmatpush1.bf16.msra.mxu0 %v190
    %212 = vmatprep.subr.bf16.mxu0 0
    %213 = vmatpush1.bf16.msra.mxu0 %v191
    %214 = vmatprep.subr.bf16.mxu0 0
    %215 = vmatpush1.bf16.msra.mxu0 %v192
    %216 = vmatprep.subr.bf16.mxu0 0
    %217 = vmatpush1.bf16.msra.mxu0 %v193
    %218 = vmatprep.subr.bf16.mxu0 0
    %219 = vmatpush1.bf16.msra.mxu0 0
    %220 = vmatprep.subr.bf16.mxu0 0
    %221 = vmatpush1.bf16.msra.mxu0 0
    %222 = vmatprep.subr.bf16.mxu0 0
    %223 = vmatpush1.bf16.msra.mxu0 0
    %224 = vmatprep.subr.bf16.mxu0 0
    %225 = vmatpush1.bf16.msra.mxu0 0
    %226 = vmatprep.subr.bf16.mxu0 0
    %227 = vmatpush1.bf16.msra.mxu0 0
    %228 = vmatprep.subr.bf16.mxu0 0
    %229 = vmatpush1.bf16.msra.mxu0 0
    %230 = vmatprep.subr.bf16.mxu0 0
    %231 = vmatpush1.bf16.msra.mxu0 0
    %232 = vmatprep.subr.bf16.mxu0 0
    %233 = vmatpush1.bf16.msra.mxu0 0
    %234 = vmatprep.mubr.bf16.mxu0 0
    %235 = vmatmul.mubr.bf16.gmra.mrb[0].mxu0 %v128
    %v236 = vpop.f32.mrb[0].mxu0
    %v237 = vadd.f32 %v152, %v236
    %v238 = vpop.f32.mrb[0].mxu0
    %v239 = vpop.f32.mrb[0].mxu0
    %v240 = vpop.f32.mrb[0].mxu0
    %241 = vdwg.mxu0
    %v242 = vmax.f32 %v237, 0.0
    %v243 = vpack.c.bf16 %v242, %v242
    %s244 = scalar_lea.vmem [#allocation5], 128
    %v245 = vld [vmem:[%s244] sm:$0xf]
    %v246 = vld [vmem:[%s244 + $0x4] sm:$0xf]
    %v247 = vld [vmem:[%s244 + $0x8] sm:$0xf]
    %v248 = vld [vmem:[%s244 + $0xc] sm:$0xf]
    %v249 = vld [vmem:[%s244 + $0x10] sm:$0xf]
    %v250 = vld [vmem:[%s244 + $0x14] sm:$0xf]
    %v251 = vld [vmem:[%s244 + $0x18] sm:$0xf]
    %v252 = vld [vmem:[%s244 + $0x1c] sm:$0xf]
    %v253 = vld [vmem:[%s244 + $0x20] sm:$0xf]
    %v254 = vld [vmem:[%s244 + $0x24] sm:$0xf]
    %v255 = vld [vmem:[%s244 + $0x28] sm:$0xf]
    %v256 = vld [vmem:[%s244 + $0x2c] sm:$0xf]
    %v257 = vld [vmem:[%s244 + $0x30] sm:$0xf]
    %v258 = vld [vmem:[%s244 + $0x34] sm:$0xf]
    %v259 = vld [vmem:[%s244 + $0x38] sm:$0xf]
    %v260 = vld [vmem:[%s244 + $0x3c] sm:$0xf]
    %s261 = scalar_lea.vmem %s2, 2
    %v262 = vld [vmem:[%s261] sm:$0x1]
    %v264 = vlaneseq
    %v265 = vshrl.u32 %v264, 7
    %v266 = vsub.s32 0, %v265
    %v267 = vrot.slane %v262, %v266
    %v285 = vunpack.c.l.b16 %v245
    %v286 = vunpack.c.l.b16 %v246
    %v287 = vunpack.c.l.b16 %v247
    %v288 = vunpack.c.l.b16 %v248
    %v289 = vunpack.c.l.b16 %v249
    %v290 = vunpack.c.l.b16 %v250
    %v291 = vunpack.c.l.b16 %v251
    %v292 = vunpack.c.l.b16 %v252
    %v293 = vunpack.c.l.b16 %v253
    %v294 = vunpack.c.l.b16 %v254
    %v295 = vunpack.c.l.b16 %v255
    %v296 = vunpack.c.l.b16 %v256
    %v297 = vunpack.c.l.b16 %v257
    %v298 = vunpack.c.l.b16 %v258
    %v299 = vunpack.c.l.b16 %v259
    %v300 = vunpack.c.l.b16 %v260
    %v301 = vpack.c.b16 %v286, %v285
    %v302 = vpack.c.b16 %v288, %v287
    %v303 = vpack.c.b16 %v290, %v289
    %v304 = vpack.c.b16 %v292, %v291
    %v305 = vpack.c.b16 %v294, %v293
    %v306 = vpack.c.b16 %v296, %v295
    %v307 = vpack.c.b16 %v298, %v297
    %v308 = vpack.c.b16 %v300, %v299
    %317 = vmatprep.subr.bf16.mxu0 0
    %318 = vmatpush1.bf16.msra.mxu0 %v301
    %319 = vmatprep.subr.bf16.mxu0 0
    %320 = vmatpush1.bf16.msra.mxu0 %v302
    %321 = vmatprep.subr.bf16.mxu0 0
    %322 = vmatpush1.bf16.msra.mxu0 %v303
    %323 = vmatprep.subr.bf16.mxu0 0
    %324 = vmatpush1.bf16.msra.mxu0 %v304
    %325 = vmatprep.subr.bf16.mxu0 0
    %326 = vmatpush1.bf16.msra.mxu0 %v305
    %327 = vmatprep.subr.bf16.mxu0 0
    %328 = vmatpush1.bf16.msra.mxu0 %v306
    %329 = vmatprep.subr.bf16.mxu0 0
    %330 = vmatpush1.bf16.msra.mxu0 %v307
    %331 = vmatprep.subr.bf16.mxu0 0
    %332 = vmatpush1.bf16.msra.mxu0 %v308
    %333 = vmatprep.subr.bf16.mxu0 0
    %334 = vmatpush1.bf16.msra.mxu0 0
    %335 = vmatprep.subr.bf16.mxu0 0
    %336 = vmatpush1.bf16.msra.mxu0 0
    %337 = vmatprep.subr.bf16.mxu0 0
    %338 = vmatpush1.bf16.msra.mxu0 0
    %339 = vmatprep.subr.bf16.mxu0 0
    %340 = vmatpush1.bf16.msra.mxu0 0
    %341 = vmatprep.subr.bf16.mxu0 0
    %342 = vmatpush1.bf16.msra.mxu0 0
    %343 = vmatprep.subr.bf16.mxu0 0
    %344 = vmatpush1.bf16.msra.mxu0 0
    %345 = vmatprep.subr.bf16.mxu0 0
    %346 = vmatpush1.bf16.msra.mxu0 0
    %347 = vmatprep.subr.bf16.mxu0 0
    %348 = vmatpush1.bf16.msra.mxu0 0
    %349 = vmatprep.mubr.bf16.mxu0 0
    %350 = vmatmul.mubr.bf16.gmra.mrb[0].mxu0 %v243
    %v351 = vpop.f32.mrb[0].mxu0
    %v352 = vadd.f32 %v267, %v351
    %v353 = vpop.f32.mrb[0].mxu0
    %v354 = vpop.f32.mrb[0].mxu0
    %v355 = vpop.f32.mrb[0].mxu0
    %356 = vdwg.mxu0
    %v357 = vtanh.pop %v352
    %v358 = vpack.c.bf16 %v357, %v357
    %359 = vst [vmem:[#allocation7] sm:$0xf] %v358
    // Predicated region
    $region22: #{tpu_custom_call.1} parent=1 // pred_check
      _
    $region23: #{tpu_custom_call.1} parent=1 // pred_check_branch
      %361 = sbr.rel (0) target = $region25
    $region24: #{tpu_custom_call.1} parent=1 // pred_region
      %s363 = ssub.s32 64, 64
      %364 = vsyncadd [#allocation4], %s363
      %s366 = sshll.u32 [#allocation7], 4
      %s367 = int_to_ptr.vmem [resolvable:$true] %s366
      %369 = dma.vmem_to_hbm [thread:$0]  %s367, 64, %s3, [#allocation4]
    $region25: #{tpu_custom_call.1} parent=1 // pred_fallthru
      _
    // Predicated region
    $region26: #{tpu_custom_call.1} parent=1 // pred_check
      _
    $region27: #{tpu_custom_call.1} parent=1 // pred_check_branch
      %371 = sbr.rel (0) target = $region29
    $region28: #{tpu_custom_call.1} parent=1 // pred_region
      %372 = dma.done [#allocation4], 64
    $region29: #{tpu_custom_call.1} parent=1 // pred_fallthru
      _
    %373 = vsyncpa [#allocation3], 1
    %374 = vsyncpa [#allocation6], 1
    %375 = vsyncpa [#allocation4], 1

</llo_original>
